<compile_context>
chip_gen: v6e
topology: v6e:2x2x1
jax: 0.10.0
libtpu: 0.0.40
codegen_flags: <defaults>
</compile_context>

<pallas_src>
import functools

import jax
import jax.numpy as jnp
from jax.experimental import pallas as pl
from jax.experimental.pallas import tpu as pltpu


def _round_up(n: int, m: int) -> int:
    return ((n + m - 1) // m) * m


def skip_connection_kernel(seed_ref, x_ref, gamma_ref, beta_ref, w_ref, bias_ref,
                           o_ref, y_ref, *, eps: float, dropout_rate: float,
                           f_valid: int):
    i = pl.program_id(0)
    j = pl.program_id(1)
    tile_m, f_pad = x_ref.shape
    tile_n = o_ref.shape[1]

    # --- LayerNorm over the (padded) feature axis, f32 stats, computed once per
    #     token tile (j == 0) and cached in bf16 VMEM scratch for all j tiles. ---
    @pl.when(j == 0)
    def _compute_layernorm():
        x = x_ref[...].astype(jnp.float32)                           # (tile_m, f_pad)
        if f_valid == f_pad:
            mean = jnp.mean(x, axis=-1, keepdims=True)
            d = x - mean
            var = jnp.mean(d * d, axis=-1, keepdims=True)
        else:
            # Mask zero-padded feature columns so they don't corrupt mean/var.
            col = jax.lax.broadcasted_iota(jnp.int32, (tile_m, f_pad), 1)
            valid = col < f_valid
            inv_f = jnp.float32(1.0 / f_valid)
            mean = jnp.sum(jnp.where(valid, x, 0.0), axis=-1, keepdims=True) * inv_f
            d = jnp.where(valid, x - mean, 0.0)
            var = jnp.sum(d * d, axis=-1, keepdims=True) * inv_f
        xn = d * jax.lax.rsqrt(var + eps)
        # gamma/beta are zero-padded, so padded columns of y are exactly 0.
        y = xn * gamma_ref[...] + beta_ref[...]                      # (tile_m, f_pad)
        y_ref[...] = y.astype(jnp.bfloat16)

    # --- connector: Linear slab on the MXU, bf16 operands, f32 accumulation ---
    h = jnp.dot(y_ref[...], w_ref[...], preferred_element_type=jnp.float32)
    h = h + bias_ref[...].astype(jnp.float32)                        # (tile_m, tile_n)

    # --- dropout (train-mode inverted dropout) via counter-based hash PRNG ---
    if dropout_rate > 0.0:
        keep_prob = 1.0 - dropout_rate
        # Clamp so keep_prob ~= 1.0 cannot wrap the uint32 threshold to 0.
        thr = min(int(round(keep_prob * 4294967296.0)), 4294967295)
        seed_u = seed_ref[0].astype(jnp.uint32)
        row_g = (jax.lax.broadcasted_iota(jnp.uint32, (tile_m, tile_n), 0)
                 + (i * tile_m).astype(jnp.uint32))
        col_g = (jax.lax.broadcasted_iota(jnp.uint32, (tile_m, tile_n), 1)
                 + (j * tile_n).astype(jnp.uint32))
        bits = row_g * jnp.uint32(f_pad) + col_g                     # unique element id
        bits = bits * jnp.uint32(0x9E3779B1) + seed_u * jnp.uint32(0x85EBCA77)
        bits = bits ^ (bits >> 16)
        bits = bits * jnp.uint32(0x7FEB352D)
        bits = bits ^ (bits >> 15)
        bits = bits * jnp.uint32(0x846CA68B)
        bits = bits ^ (bits >> 16)
        # Single select folds the mask and the 1/keep_prob scale.
        h = h * jnp.where(bits < jnp.uint32(thr),
                          jnp.float32(1.0 / keep_prob), jnp.float32(0.0))

    # --- residual add with the un-normalized input (this output-column slice) ---
    start = pl.multiple_of(j * tile_n, 128)
    x_res = x_ref[:, pl.ds(start, tile_n)].astype(jnp.float32)
    o_ref[...] = (x_res + h).astype(o_ref.dtype)


def skip_connection(x, gamma, beta, w, bias, seed, *,
                    eps: float = 1e-6, dropout_rate: float = 0.0,
                    tile_m: int = None, tile_n: int = None):
    """x: (..., F). gamma/beta/bias: (F,). w: (F, F) laid out so y @ w == PyTorch Linear."""
    orig_shape = x.shape
    F = orig_shape[-1]
    x2d = x.reshape(-1, F)
    N = x2d.shape[0]

    # Lane-dense feature axis: pad F to a multiple of 128.
    F_pad = _round_up(F, 128)
    if tile_n is None:
        tile_n = min(F_pad, 512)
    assert tile_n % 128 == 0 and F_pad % tile_n == 0

    # Token tiling: multiple of 8 (f32 sublane), default up to 256 (MXU M edge).
    if tile_m is None:
        tile_m = min(256, _round_up(N, 8))
    assert tile_m % 8 == 0
    N_pad = _round_up(N, tile_m)

    # Zero padding: padded rows LayerNorm to 0 (rsqrt(0 + eps) is finite) and get sliced off.
    x2d = jnp.pad(x2d, ((0, N_pad - N), (0, F_pad - F)))
    gamma2d = jnp.pad(gamma, (0, F_pad - F)).reshape(1, F_pad).astype(jnp.float32)
    beta2d = jnp.pad(beta, (0, F_pad - F)).reshape(1, F_pad).astype(jnp.float32)
    bias2d = jnp.pad(bias, (0, F_pad - F)).reshape(1, F_pad).astype(jnp.float32)
    w_p = jnp.pad(w, ((0, F_pad - F), (0, F_pad - F))).astype(jnp.bfloat16)  # bf16 MXU path
    seed_arr = jnp.asarray([seed], dtype=jnp.int32)

    kernel = functools.partial(skip_connection_kernel,
                               eps=eps, dropout_rate=dropout_rate, f_valid=F)

    # VMEM budget: double-buffered x/out blocks + weight slab (bf16) + y cache + params.
    vmem_est = (2 * tile_m * F_pad * 4          # x blocks (double-buffered)
                + 2 * tile_m * tile_n * 4       # out blocks
                + 2 * F_pad * tile_n * 2        # bf16 weight slabs
                + tile_m * F_pad * 2            # bf16 LayerNorm cache (scratch)
                + 8 * F_pad * 4)                # gamma/beta/bias
    vmem_limit = int(min(max(2 * vmem_est, 16 * 1024 * 1024), 48 * 1024 * 1024))

    out2d = pl.pallas_call(
        kernel,
        out_shape=jax.ShapeDtypeStruct((N_pad, F_pad), x.dtype),
        grid_spec=pltpu.PrefetchScalarGridSpec(
            num_scalar_prefetch=1,
            grid=(N_pad // tile_m, F_pad // tile_n),
            in_specs=[
                pl.BlockSpec((tile_m, F_pad), lambda i, j, s: (i, 0)),   # x (full row for LN)
                pl.BlockSpec((1, F_pad), lambda i, j, s: (0, 0)),        # gamma
                pl.BlockSpec((1, F_pad), lambda i, j, s: (0, 0)),        # beta
                pl.BlockSpec((F_pad, tile_n), lambda i, j, s: (0, j)),   # weight slab
                pl.BlockSpec((1, tile_n), lambda i, j, s: (0, j)),       # bias slab
            ],
            out_specs=pl.BlockSpec((tile_m, tile_n), lambda i, j, s: (i, j)),
            scratch_shapes=[pltpu.VMEM((tile_m, F_pad), jnp.bfloat16)],  # cached LN(x)
        ),
        compiler_params=pltpu.CompilerParams(
            # Token tiles are independent (hash PRNG keyed on global element index) ->
            # i axis shards across v7x's two TensorCores.  j is "arbitrary" so the
            # LayerNorm cache in scratch stays valid across output-column tiles.
            dimension_semantics=("parallel", "arbitrary"),
            vmem_limit_bytes=vmem_limit),
    )(seed_arr, x2d, gamma2d, beta2d, w_p, bias2d)

    return out2d[:N, :F].reshape(orig_shape)


def _reference(x, gamma, beta, w, bias, eps):
    """Pure-JAX reference, dropout disabled (eval-mode nn.Dropout is identity).
    Matmul matches the kernel's bf16-operand / f32-accumulate path."""
    mean = jnp.mean(x, axis=-1, keepdims=True)
    var = jnp.mean(jnp.square(x - mean), axis=-1, keepdims=True)
    y = (x - mean) * jax.lax.rsqrt(var + eps) * gamma + beta
    h = jnp.dot(y.astype(jnp.bfloat16), w.astype(jnp.bfloat16),
                preferred_element_type=jnp.float32) + bias
    return x + h


if __name__ == "__main__":
    key = jax.random.PRNGKey(0)
    B, S, F = 2, 8, 32  # batch=2, seq=8, features_size=32
    k_x, k_g, k_b, k_w, k_bias = jax.random.split(key, 5)

    x = jax.random.normal(k_x, (B, S, F), dtype=jnp.float32)
    # Deterministic synthetic parameters (no checkpoint load).
    gamma = jnp.ones((F,), jnp.float32) + 0.1 * jax.random.normal(k_g, (F,), jnp.float32)
    beta = 0.1 * jax.random.normal(k_b, (F,), jnp.float32)
    # PyTorch Linear stores W as (out, in) and computes y @ W.T; pre-transpose here.
    w_torch = jax.random.normal(k_w, (F, F), jnp.float32) / jnp.sqrt(F)
    w = w_torch.T
    bias = 0.1 * jax.random.normal(k_bias, (F,), jnp.float32)

    # 1) dropout=0.0 path (eval mode): check against the reference.
    out_eval = skip_connection(x, gamma, beta, w, bias, seed=0,
                               eps=1e-6, dropout_rate=0.0)
    jax.block_until_ready(out_eval)
    ref = _reference(x, gamma, beta, w, bias, eps=1e-6)
    assert out_eval.shape == (B, S, F)
    assert jnp.allclose(out_eval, ref, atol=2e-2, rtol=2e-2), "mismatch vs reference"

    # 2) dropout=0.1 path (train-mode semantics, in-kernel hash PRNG).
    out_train = skip_connection(x, gamma, beta, w, bias, seed=123,
                                eps=1e-6, dropout_rate=0.1)
    jax.block_until_ready(out_train)
    assert out_train.shape == (B, S, F)
    assert bool(jnp.all(jnp.isfinite(out_train)))
    # Where an element is dropped, out == x exactly (residual + 0); fraction ≈ dropout_rate.
    frac_dropped = float(jnp.mean((out_train == x).astype(jnp.float32)))
    assert 0.01 < frac_dropped < 0.3, f"unexpected dropout fraction {frac_dropped}"

    print("KERNEL_OK")
</pallas_src>

<mosaic_0001>
module attributes {stable_mosaic.version = 11 : i64} {
  func.func @skip_connection_kernel(%arg0: i32, %arg1: i32, %arg2: memref<1xi32, #tpu.memory_space<smem>>, %arg3: memref<16x128xf32, #tpu.memory_space<vmem>>, %arg4: memref<1x128xf32, #tpu.memory_space<vmem>>, %arg5: memref<1x128xf32, #tpu.memory_space<vmem>>, %arg6: memref<128x128xbf16, #tpu.memory_space<vmem>>, %arg7: memref<1x128xf32, #tpu.memory_space<vmem>>, %arg8: memref<16x128xf32, #tpu.memory_space<vmem>>, %arg9: memref<16x128xbf16, #tpu.memory_space<vmem>>) attributes {dimension_semantics = [#tpu.dimension_semantics<parallel>, #tpu.dimension_semantics<arbitrary>], iteration_bounds = array<i64: 1, 1>, scalar_prefetch = 1 : i64, scratch_operands = 1 : i64, tpu.core_type = #tpu.core_type<tc>, window_params = [{transform_indices = @transform_0, window_bounds = array<i64: 16, 128>}, {pipeline_mode = #tpu.pipeline_mode<synchronous>, transform_indices = @transform_1, window_bounds = array<i64: 1, 128>}, {pipeline_mode = #tpu.pipeline_mode<synchronous>, transform_indices = @transform_2, window_bounds = array<i64: 1, 128>}, {transform_indices = @transform_3, window_bounds = array<i64: 128, 128>}, {transform_indices = @transform_4, window_bounds = array<i64: 1, 128>}, {transform_indices = @transform_5, window_bounds = array<i64: 16, 128>}]} {
    %c0_i32 = arith.constant 0 : i32
    %0 = arith.cmpi eq, %arg1, %c0_i32 : i32
    %1 = arith.extui %0 : i1 to i32
    %c0_i32_0 = arith.constant 0 : i32
    %2 = arith.cmpi ne, %1, %c0_i32_0 : i32
    scf.if %2 {
      %c0_9 = arith.constant 0 : index
      %c0_10 = arith.constant 0 : index
      %15 = vector.load %arg3[%c0_9, %c0_10] : memref<16x128xf32, #tpu.memory_space<vmem>>, vector<16x128xf32>
      %16 = tpu.iota {dimensions = array<i32: 1>} : vector<16x128xi32>
      %c32_i32 = arith.constant 32 : i32
      %17 = vector.broadcast %c32_i32 : i32 to vector<16x128xi32>
      %18 = arith.cmpi slt, %16, %17 : vector<16x128xi32>
      %cst_11 = arith.constant 0.000000e+00 : f32
      %19 = vector.broadcast %cst_11 : f32 to vector<16x128xf32>
      %20 = arith.select %18, %15, %19 : vector<16x128xi1>, vector<16x128xf32>
      %cst_12 = arith.constant dense<0.000000e+00> : vector<16xf32>
      %21 = vector.multi_reduction <add>, %20, %cst_12 [1] : vector<16x128xf32> to vector<16xf32>
      %22 = vector.shape_cast %21 : vector<16xf32> to vector<16x1xf32>
      %cst_13 = arith.constant 3.125000e-02 : f32
      %23 = vector.broadcast %cst_13 : f32 to vector<16x1xf32>
      %24 = arith.mulf %22, %23 : vector<16x1xf32>
      %25 = vector.broadcast %24 : vector<16x1xf32> to vector<16x128xf32>
      %26 = arith.subf %15, %25 : vector<16x128xf32>
      %cst_14 = arith.constant 0.000000e+00 : f32
      %27 = vector.broadcast %cst_14 : f32 to vector<16x128xf32>
      %28 = arith.select %18, %26, %27 : vector<16x128xi1>, vector<16x128xf32>
      %29 = arith.mulf %28, %28 : vector<16x128xf32>
      %cst_15 = arith.constant dense<0.000000e+00> : vector<16xf32>
      %30 = vector.multi_reduction <add>, %29, %cst_15 [1] : vector<16x128xf32> to vector<16xf32>
      %31 = vector.shape_cast %30 : vector<16xf32> to vector<16x1xf32>
      %cst_16 = arith.constant 3.125000e-02 : f32
      %32 = vector.broadcast %cst_16 : f32 to vector<16x1xf32>
      %33 = arith.mulf %31, %32 : vector<16x1xf32>
      %cst_17 = arith.constant 9.99999997E-7 : f32
      %34 = vector.broadcast %cst_17 : f32 to vector<16x1xf32>
      %35 = arith.addf %33, %34 : vector<16x1xf32>
      %36 = math.rsqrt %35 : vector<16x1xf32>
      %37 = vector.broadcast %36 : vector<16x1xf32> to vector<16x128xf32>
      %38 = arith.mulf %28, %37 : vector<16x128xf32>
      %c0_18 = arith.constant 0 : index
      %c0_19 = arith.constant 0 : index
      %39 = vector.load %arg4[%c0_18, %c0_19] : memref<1x128xf32, #tpu.memory_space<vmem>>, vector<1x128xf32>
      %40 = vector.broadcast %39 : vector<1x128xf32> to vector<16x128xf32>
      %41 = arith.mulf %38, %40 : vector<16x128xf32>
      %c0_20 = arith.constant 0 : index
      %c0_21 = arith.constant 0 : index
      %42 = vector.load %arg5[%c0_20, %c0_21] : memref<1x128xf32, #tpu.memory_space<vmem>>, vector<1x128xf32>
      %43 = vector.broadcast %42 : vector<1x128xf32> to vector<16x128xf32>
      %44 = arith.addf %41, %43 : vector<16x128xf32>
      %45 = arith.truncf %44 : vector<16x128xf32> to vector<16x128xbf16>
      %c0_22 = arith.constant 0 : index
      %c0_23 = arith.constant 0 : index
      %46 = vector.load %arg9[%c0_22, %c0_23] : memref<16x128xbf16, #tpu.memory_space<vmem>>, vector<16x128xbf16>
      tpu.vector_store %arg9[%c0_22, %c0_23], %45 {strides = array<i32>} : memref<16x128xbf16, #tpu.memory_space<vmem>>, vector<16x128xbf16>,
    } else {
    }
    %c0 = arith.constant 0 : index
    %c0_1 = arith.constant 0 : index
    %3 = vector.load %arg9[%c0, %c0_1] : memref<16x128xbf16, #tpu.memory_space<vmem>>, vector<16x128xbf16>
    %c0_2 = arith.constant 0 : index
    %c0_3 = arith.constant 0 : index
    %4 = vector.load %arg6[%c0_2, %c0_3] : memref<128x128xbf16, #tpu.memory_space<vmem>>, vector<128x128xbf16>
    %cst = arith.constant dense<0.000000e+00> : vector<16x128xf32>
    %5 = tpu.matmul %3, %4, %cst {dimension_numbers = #tpu.dot_dimension_numbers<[1], [0], [0], [1], [0, 0, 1, 1], [], []>} : vector<16x128xbf16>, vector<128x128xbf16>, vector<16x128xf32> -> vector<16x128xf32>
    %c0_4 = arith.constant 0 : index
    %c0_5 = arith.constant 0 : index
    %6 = vector.load %arg7[%c0_4, %c0_5] : memref<1x128xf32, #tpu.memory_space<vmem>>, vector<1x128xf32>
    %7 = vector.broadcast %6 : vector<1x128xf32> to vector<16x128xf32>
    %8 = arith.addf %5, %7 : vector<16x128xf32>
    %c128_i32 = arith.constant 128 : i32
    %9 = arith.muli %arg1, %c128_i32 : i32
    %10 = tpu.assume_multiple %9, 128 : i32
    %c0_6 = arith.constant 0 : index
    %11 = arith.index_cast %10 : i32 to index
    %12 = vector.load %arg3[%c0_6, %11] : memref<16x128xf32, #tpu.memory_space<vmem>>, vector<16x128xf32>
    %13 = arith.addf %12, %8 : vector<16x128xf32>
    %c0_7 = arith.constant 0 : index
    %c0_8 = arith.constant 0 : index
    %14 = vector.load %arg8[%c0_7, %c0_8] : memref<16x128xf32, #tpu.memory_space<vmem>>, vector<16x128xf32>
    tpu.vector_store %arg8[%c0_7, %c0_8], %13 {strides = array<i32>} : memref<16x128xf32, #tpu.memory_space<vmem>>, vector<16x128xf32>,
    return
  }
  func.func @transform_0(%arg0: i32, %arg1: i32, %arg2: memref<1xi32, #tpu.memory_space<smem>>) -> (i32, i32) {
    %c0_i32 = arith.constant 0 : i32
    %c0_i32_0 = arith.constant 0 : i32
    return %arg0, %c0_i32 : i32, i32
  }
  func.func @transform_1(%arg0: i32, %arg1: i32, %arg2: memref<1xi32, #tpu.memory_space<smem>>) -> (i32, i32) {
    %c0_i32 = arith.constant 0 : i32
    %c0_i32_0 = arith.constant 0 : i32
    %c0_i32_1 = arith.constant 0 : i32
    return %c0_i32, %c0_i32_0 : i32, i32
  }
  func.func @transform_2(%arg0: i32, %arg1: i32, %arg2: memref<1xi32, #tpu.memory_space<smem>>) -> (i32, i32) {
    %c0_i32 = arith.constant 0 : i32
    %c0_i32_0 = arith.constant 0 : i32
    %c0_i32_1 = arith.constant 0 : i32
    return %c0_i32, %c0_i32_0 : i32, i32
  }
  func.func @transform_3(%arg0: i32, %arg1: i32, %arg2: memref<1xi32, #tpu.memory_space<smem>>) -> (i32, i32) {
    %c0_i32 = arith.constant 0 : i32
    %c0_i32_0 = arith.constant 0 : i32
    return %c0_i32, %arg1 : i32, i32
  }
  func.func @transform_4(%arg0: i32, %arg1: i32, %arg2: memref<1xi32, #tpu.memory_space<smem>>) -> (i32, i32) {
    %c0_i32 = arith.constant 0 : i32
    %c0_i32_0 = arith.constant 0 : i32
    return %c0_i32, %arg1 : i32, i32
  }
  func.func @transform_5(%arg0: i32, %arg1: i32, %arg2: memref<1xi32, #tpu.memory_space<smem>>) -> (i32, i32) {
    %c0_i32 = arith.constant 0 : i32
    return %arg0, %arg1 : i32, i32
  }
}

</mosaic_0001>

<llo_original>
// kernel: tpu_custom_call.1
$region0: #{tpu_custom_call.1}
  #allocation0 [shape = 'u32[]', space=smem, size = 0x4, offset = 0x4, fixed_abs, tag = 'smem constant byte address 0x4 - core index']
  #allocation1 [shape = 'u32[144,128]{1,0:T(1,128)}', space=vmem, size = 0x12000, scoped, tag = 'internal scratch']
  #allocation2 [shape = 'bf16[16,128]{1,0:T(8,128)(2,1)}', space=vmem, size = 0x1000, scoped, tag = 'scratch operand']
  #allocation3 [shape = 's32[1]{0}', space=sflag, size = 0x4, scoped, tag = 'scoped memory for tpu_custom_call.1']
  #allocation4 [shape = 's32[1]{0:T(128)S(6)}', space=smem, size = 0x200, scoped, tag = 'prefetched SMEM operand 0']
  %s0 = inlined_call_operand.<no memory space> [shape: s32[1], index: 0, kind: input, shape index: {}]
  %s1 = inlined_call_operand.hbm [shape: f32[16,128], index: 1, kind: input, shape index: {}]
  %s2 = inlined_call_operand.vmem [shape: f32[1,128], index: 2, kind: input, shape index: {}]
  %s3 = inlined_call_operand.vmem [shape: f32[1,128], index: 3, kind: input, shape index: {}]
  %s4 = inlined_call_operand.hbm [shape: bf16[128,128], index: 4, kind: input, shape index: {}]
  %s5 = inlined_call_operand.vmem [shape: f32[1,128], index: 5, kind: input, shape index: {}]
  %s6 = inlined_call_operand.hbm [shape: f32[16,128], index: 6, kind: output, shape index: {}]
  %s7 = sld [smem:[#allocation0]]
  $region42: #{tpu_custom_call.1} parent=0
    _
  %s9 = ssub.s32 1, %s7
  %s10 = scalar_select 0, %s9, %s7
  %11 = sst [smem:[#allocation4]] %s0
  $region1: #{tpu_custom_call.1} parent=0
    #allocation5 [shape = 'u8[8192]{0}', space=vmem, size = 0x2000, scoped, tag = 'input window, operand 1, single buffered']
    #allocation6 [shape = 's32[1]{0}', space=sflag, size = 0x4, scoped, tag = 'scoped memory for tpu_custom_call.1']
    #allocation7 [shape = 's32[1]{0}', space=sflag, size = 0x4, scoped, tag = 'scoped memory for tpu_custom_call.1']
    #allocation8 [shape = 'u8[32768]{0}', space=vmem, size = 0x8000, scoped, tag = 'input window, operand 4, single buffered']
    #allocation9 [shape = 's32[1]{0}', space=sflag, size = 0x4, scoped, tag = 'scoped memory for tpu_custom_call.1']
    #allocation10 [shape = 'u8[8192]{0}', space=vmem, size = 0x2000, scoped, tag = 'output window, operand 0, single buffered']
    %12 = vsyncpa [#allocation6], 0
    %13 = vsyncpa [#allocation9], 0
    %14 = vsyncpa [#allocation7], 0
    // Predicated region
    $region2: #{tpu_custom_call.1} parent=1 // pred_check
      _
    $region3: #{tpu_custom_call.1} parent=1 // pred_check_branch
      %16 = sbr.rel (0) target = $region5
    $region4: #{tpu_custom_call.1} parent=1 // pred_region
      %s18 = ssub.s32 256, 256
      %19 = vsyncadd [#allocation6], %s18
      %s20 = sshll.u32 [#allocation5], 4
      %s21 = int_to_ptr.vmem [resolvable:$true] %s20
      %26 = dma.hbm_to_vmem [thread:$0]  %s1, 256, %s21, [#allocation6], 128, 128, 8
    $region5: #{tpu_custom_call.1} parent=1 // pred_fallthru
      _
    // Predicated region
    $region6: #{tpu_custom_call.1} parent=1 // pred_check
      _
    $region7: #{tpu_custom_call.1} parent=1 // pred_check_branch
      %28 = sbr.rel (0) target = $region9
    $region8: #{tpu_custom_call.1} parent=1 // pred_region
      _
    $region9: #{tpu_custom_call.1} parent=1 // pred_fallthru
      _
    // Predicated region
    $region10: #{tpu_custom_call.1} parent=1 // pred_check
      _
    $region11: #{tpu_custom_call.1} parent=1 // pred_check_branch
      %30 = sbr.rel (0) target = $region13
    $region12: #{tpu_custom_call.1} parent=1 // pred_region
      _
    $region13: #{tpu_custom_call.1} parent=1 // pred_fallthru
      _
    // Predicated region
    $region14: #{tpu_custom_call.1} parent=1 // pred_check
      _
    $region15: #{tpu_custom_call.1} parent=1 // pred_check_branch
      %32 = sbr.rel (0) target = $region17
    $region16: #{tpu_custom_call.1} parent=1 // pred_region
      %s34 = ssub.s32 1024, 1024
      %35 = vsyncadd [#allocation9], %s34
      %s36 = sshll.u32 [#allocation8], 4
      %s37 = int_to_ptr.vmem [resolvable:$true] %s36
      %42 = dma.hbm_to_vmem [thread:$0]  %s4, 1024, %s37, [#allocation9], 64, 64, 4
    $region17: #{tpu_custom_call.1} parent=1 // pred_fallthru
      _
    // Predicated region
    $region18: #{tpu_custom_call.1} parent=1 // pred_check
      _
    $region19: #{tpu_custom_call.1} parent=1 // pred_check_branch
      %44 = sbr.rel (0) target = $region21
    $region20: #{tpu_custom_call.1} parent=1 // pred_region
      _
    $region21: #{tpu_custom_call.1} parent=1 // pred_fallthru
      _
    // Predicated region
    $region22: #{tpu_custom_call.1} parent=1 // pred_check
      _
    $region23: #{tpu_custom_call.1} parent=1 // pred_check_branch
      %46 = sbr.rel (0) target = $region25
    $region24: #{tpu_custom_call.1} parent=1 // pred_region
      %47 = dma.done [#allocation6], 256
    $region25: #{tpu_custom_call.1} parent=1 // pred_fallthru
      _
    // Predicated region
    $region26: #{tpu_custom_call.1} parent=1 // pred_check
      _
    $region27: #{tpu_custom_call.1} parent=1 // pred_check_branch
      %49 = sbr.rel (0) target = $region29
    $region28: #{tpu_custom_call.1} parent=1 // pred_region
      %50 = dma.done [#allocation9], 1024
    $region29: #{tpu_custom_call.1} parent=1 // pred_fallthru
      _
    %p52 = scmp.eq.s32.totalorder 0, 0
    // Predicated region
    $region30: #{tpu_custom_call.1} parent=1 // pred_check
      %p53 = pneg %p52
    $region31: #{tpu_custom_call.1} parent=1 // pred_check_branch
      %55 = sbr.rel (%p53) target = $region33
    $region32: #{tpu_custom_call.1} parent=1 // pred_region
      %v56 = vld [vmem:[#allocation5] sm:$0xff]
      %v57 = vld [vmem:[#allocation5 + $0x8] sm:$0xff]
      %v58 = vlaneseq
      %v59 = vand.u32 %v58, 127
      %vm60 = vcmp.lt.s32.totalorder %v59, 32
      %v61 = vsel %vm60, %v56, 0.0
      %v62 = vsel %vm60, %v57, 0.0
      %63 = vadd.xlane.f32.xlu0 %v61
      %v64 = vpop.xlane.xlu0 %63
      %65 = vadd.xlane.f32.xlu0 %v62
      %v66 = vpop.xlane.xlu0 %65
      %v67 = vmul.f32 %v64, 0.03125
      %v68 = vmul.f32 %v66, 0.03125
      %v69 = vsub.f32 %v56, %v67
      %v70 = vsub.f32 %v57, %v68
      %v71 = vsel %vm60, %v69, 0.0
      %v72 = vsel %vm60, %v70, 0.0
      %v73 = vmul.f32 %v71, %v71
      %v74 = vmul.f32 %v72, %v72
      %75 = vadd.xlane.f32.xlu0 %v73
      %v76 = vpop.xlane.xlu0 %75
      %77 = vadd.xlane.f32.xlu0 %v74
      %v78 = vpop.xlane.xlu0 %77
      %v79 = vmul.f32 %v76, 0.03125
      %v80 = vmul.f32 %v78, 0.03125
      %v81 = vadd.f32 %v79, 1e-06
      %v82 = vadd.f32 %v80, 1e-06
      %v83 = vrsqrt.pop %v81
      %v84 = vrsqrt.pop %v82
      %v85 = vmul.f32 %v71, %v83
      %v86 = vmul.f32 %v72, %v84
      %v87 = vld [vmem:[%s2] sm:$0x1]
      %v89 = vlaneseq
      %v90 = vshrl.u32 %v89, 7
      %v91 = vsub.s32 0, %v90
      %v92 = vrot.slane %v87, %v91
      %v94 = vmul.f32 %v85, %v92
      %v95 = vmul.f32 %v86, %v92
      %v96 = vld [vmem:[%s3] sm:$0x1]
      %v98 = vlaneseq
      %v99 = vshrl.u32 %v98, 7
      %v100 = vsub.s32 0, %v99
      %v101 = vrot.slane %v96, %v100
      %v103 = vadd.f32 %v94, %v101
      %v104 = vadd.f32 %v95, %v101
      %v105 = vpack.c.bf16 %v104, %v103
      %v107 = vunpack.c.l.b16 %v105
      %v108 = vunpack.c.h.b16 %v105
      %v109 = vpack.c.b16 %v107, %v107
      %v110 = vpack.c.b16 %v108, %v108
      %113 = vst [vmem:[#allocation2] sm:$0xf] %v109
      %114 = vst [vmem:[#allocation2 + $0x4] sm:$0xf] %v110
    $region33: #{tpu_custom_call.1} parent=1 // pred_fallthru
      _
    %v115 = vld [vmem:[#allocation2] sm:$0xf]
    %v116 = vld [vmem:[#allocation2 + $0x4] sm:$0xf]
    %v117 = vld [vmem:[#allocation8] sm:$0xf]
    %v118 = vld [vmem:[#allocation8 + $0x4] sm:$0xf]
    %v119 = vld [vmem:[#allocation8 + $0x8] sm:$0xf]
    %v120 = vld [vmem:[#allocation8 + $0xc] sm:$0xf]
    %v121 = vld [vmem:[#allocation8 + $0x10] sm:$0xf]
    %v122 = vld [vmem:[#allocation8 + $0x14] sm:$0xf]
    %v123 = vld [vmem:[#allocation8 + $0x18] sm:$0xf]
    %v124 = vld [vmem:[#allocation8 + $0x1c] sm:$0xf]
    %v125 = vld [vmem:[#allocation8 + $0x20] sm:$0xf]
    %v126 = vld [vmem:[#allocation8 + $0x24] sm:$0xf]
    %v127 = vld [vmem:[#allocation8 + $0x28] sm:$0xf]
    %v128 = vld [vmem:[#allocation8 + $0x2c] sm:$0xf]
    %v129 = vld [vmem:[#allocation8 + $0x30] sm:$0xf]
    %v130 = vld [vmem:[#allocation8 + $0x34] sm:$0xf]
    %v131 = vld [vmem:[#allocation8 + $0x38] sm:$0xf]
    %v132 = vld [vmem:[#allocation8 + $0x3c] sm:$0xf]
    %v133 = vld [vmem:[%s5] sm:$0x1]
    %v135 = vlaneseq
    %v136 = vshrl.u32 %v135, 7
    %v137 = vsub.s32 0, %v136
    %v138 = vrot.slane %v133, %v137
    %v142 = vunpack.c.l.b16 %v115
    %v143 = vunpack.c.l.b16 %v116
    %v144 = vpack.c.b16 %v143, %v142
    %v162 = vunpack.c.l.b16 %v117
    %v163 = vunpack.c.l.b16 %v118
    %v164 = vunpack.c.l.b16 %v119
    %v165 = vunpack.c.l.b16 %v120
    %v166 = vunpack.c.l.b16 %v121
    %v167 = vunpack.c.l.b16 %v122
    %v168 = vunpack.c.l.b16 %v123
    %v169 = vunpack.c.l.b16 %v124
    %v170 = vunpack.c.l.b16 %v125
    %v171 = vunpack.c.l.b16 %v126
    %v172 = vunpack.c.l.b16 %v127
    %v173 = vunpack.c.l.b16 %v128
    %v174 = vunpack.c.l.b16 %v129
    %v175 = vunpack.c.l.b16 %v130
    %v176 = vunpack.c.l.b16 %v131
    %v177 = vunpack.c.l.b16 %v132
    %v178 = vpack.c.b16 %v163, %v162
    %v179 = vpack.c.b16 %v165, %v164
    %v180 = vpack.c.b16 %v167, %v166
    %v181 = vpack.c.b16 %v169, %v168
    %v182 = vpack.c.b16 %v171, %v170
    %v183 = vpack.c.b16 %v173, %v172
    %v184 = vpack.c.b16 %v175, %v174
    %v185 = vpack.c.b16 %v177, %v176
    %194 = vmatprep.subr.bf16.mxu0 0
    %195 = vmatpush1.bf16.msra.mxu0 %v185
    %196 = vmatprep.subr.bf16.mxu0 0
    %197 = vmatpush1.bf16.msra.mxu0 %v184
    %198 = vmatprep.subr.bf16.mxu0 0
    %199 = vmatpush1.bf16.msra.mxu0 %v183
    %200 = vmatprep.subr.bf16.mxu0 0
    %201 = vmatpush1.bf16.msra.mxu0 %v182
    %202 = vmatprep.subr.bf16.mxu0 0
    %203 = vmatpush1.bf16.msra.mxu0 %v181
    %204 = vmatprep.subr.bf16.mxu0 0
    %205 = vmatpush1.bf16.msra.mxu0 %v180
    %206 = vmatprep.subr.bf16.mxu0 0
    %207 = vmatpush1.bf16.msra.mxu0 %v179
    %208 = vmatprep.subr.bf16.mxu0 0
    %209 = vmatpush1.bf16.msra.mxu0 %v178
    %210 = vmatprep.subr.bf16.mxu0 0
    %211 = vmatpush2.bf16.msra.mxu0 0
    %212 = vmatprep.subr.bf16.mxu0 0
    %213 = vmatpush2.bf16.msra.mxu0 0
    %214 = vmatprep.subr.bf16.mxu0 0
    %215 = vmatpush2.bf16.msra.mxu0 0
    %216 = vmatprep.subr.bf16.mxu0 0
    %217 = vmatpush2.bf16.msra.mxu0 0
    %218 = vmatprep.subr.bf16.mxu0 0
    %219 = vmatpush2.bf16.msra.mxu0 0
    %220 = vmatprep.subr.bf16.mxu0 0
    %221 = vmatpush2.bf16.msra.mxu0 0
    %222 = vmatprep.subr.bf16.mxu0 0
    %223 = vmatpush2.bf16.msra.mxu0 0
    %224 = vmatprep.subr.bf16.mxu0 0
    %225 = vmatpush2.bf16.msra.mxu0 0
    %226 = vmatprep.mubr.bf16.mxu0 0
    %227 = vmatmul.mubr.bf16.gmra.mxu0 %v144
    %v228 = vpop.f32.mrf.mxu0
    %v229 = vadd.f32 %v138, %v228
    %v230 = vpop.f32.mrf.mxu0
    %v231 = vpop.f32.mrf.mxu0
    %v232 = vadd.f32 %v138, %v231
    %v233 = vpop.f32.mrf.mxu0
    %234 = vdwg.mxu0
    %s235 = smul.u32 0, 128
    %s236 = sshra.s32 %s235, 7
    %s237 = sand.u32 %s235, 127
    %s238 = scalar_lea.vmem [#allocation5], %s236
    %v239 = vld [vmem:[%s238] sm:$0xff]
    %v240 = vld [vmem:[%s238 + $0x8] sm:$0xff]
    %v241 = vadd.f32 %v239, %v229
    %v242 = vadd.f32 %v240, %v232
    %243 = vst [vmem:[#allocation10] sm:$0xff] %v241
    %244 = vst [vmem:[#allocation10 + $0x8] sm:$0xff] %v242
    // Predicated region
    $region34: #{tpu_custom_call.1} parent=1 // pred_check
      _
    $region35: #{tpu_custom_call.1} parent=1 // pred_check_branch
      %246 = sbr.rel (0) target = $region37
    $region36: #{tpu_custom_call.1} parent=1 // pred_region
      %s248 = ssub.s32 256, 256
      %249 = vsyncadd [#allocation7], %s248
      %s250 = sshll.u32 [#allocation10], 4
      %s251 = int_to_ptr.vmem [resolvable:$true] %s250
      %256 = dma.vmem_to_hbm [thread:$0]  %s251, 256, %s6, [#allocation7], 128, 128, 8
    $region37: #{tpu_custom_call.1} parent=1 // pred_fallthru
      _
    // Predicated region
    $region38: #{tpu_custom_call.1} parent=1 // pred_check
      _
    $region39: #{tpu_custom_call.1} parent=1 // pred_check_branch
      %258 = sbr.rel (0) target = $region41
    $region40: #{tpu_custom_call.1} parent=1 // pred_region
      %259 = dma.done [#allocation7], 256
    $region41: #{tpu_custom_call.1} parent=1 // pred_fallthru
      _
    %260 = vsyncpa [#allocation6], 1
    %261 = vsyncpa [#allocation9], 1
    %262 = vsyncpa [#allocation7], 1

</llo_original>
